<compile_context>
chip_gen: v7x
topology: tpu7x:2x2x1
jax: 0.10.0
libtpu: 0.0.40
codegen_flags: <defaults>
</compile_context>

<pallas_src>
import jax
import jax.numpy as jnp
from jax.experimental import pallas as pl
from jax.experimental.pallas import tpu as pltpu

EXP = 1                         # PowSigmoid.__init__ sets self.exp = 1
LANES = 128
TARGET_TILE_BYTES = 4 * 1024 * 1024   # ~4 MiB per tile (85-90% of HBM roofline)
MIN_PALLAS_BYTES = 256 * 1024          # below this, kernel launch overhead dominates


def _round_up(v, m):
    return ((v + m - 1) // m) * m


def _static_int_pow(s, exp):
    # Static unroll; EXP == 1 -> no extra multiplies. Guarded in the wrapper.
    y = s
    for _ in range(exp - 1):
        y = y * s
    return y


def _pow_sigmoid_kernel(x_ref, o_ref):
    x = x_ref[...]
    # Compute in f32 for sub-32-bit inputs: extra EUP/VPU work is hidden under DMA.
    if jnp.dtype(x_ref.dtype).itemsize < 4:
        x = x.astype(jnp.float32)
    s = jax.nn.sigmoid(x)
    o_ref[...] = _static_int_pow(s, EXP).astype(o_ref.dtype)


def _pow_sigmoid_2d(x2d):
    """Runs the streaming kernel on a lane-dense (rows, 128) slab."""
    rows, lanes = x2d.shape
    itemsize = jnp.dtype(x2d.dtype).itemsize

    # Byte-targeted tile rows (multiple of 8 sublanes).
    target_rows = max(8, (TARGET_TILE_BYTES // (lanes * itemsize)) // 8 * 8)
    # Ensure >= 2 grid blocks so the parallel axis can shard across both TCs (v7x).
    half_rows = _round_up(pl.cdiv(rows, 2), 8)
    block_rows = max(8, min(target_rows, half_rows))
    grid = (pl.cdiv(rows, block_rows),)   # Pallas masks the ragged last block

    return pl.pallas_call(
        _pow_sigmoid_kernel,
        out_shape=jax.ShapeDtypeStruct((rows, lanes), x2d.dtype),
        grid_spec=pltpu.PrefetchScalarGridSpec(
            num_scalar_prefetch=0,
            grid=grid,
            in_specs=[pl.BlockSpec((block_rows, lanes), lambda i: (i, 0))],
            out_specs=pl.BlockSpec((block_rows, lanes), lambda i: (i, 0)),
        ),
        compiler_params=pltpu.CompilerParams(
            dimension_semantics=("parallel",),  # rows shard across both TCs on v7x
            vmem_limit_bytes=32 << 20,          # 2 bufs * (in+out) * 4 MiB = 16 MiB
        ),
    )(x2d)


def pow_sigmoid(x):
    """Applies sigmoid(x) ** EXP elementwise. Accepts any shape (e.g. NCHW)."""
    orig_shape = x.shape
    orig_dtype = x.dtype
    n = x.size
    nbytes = n * jnp.dtype(orig_dtype).itemsize

    # The static unroll in the kernel assumes a positive integer exponent.
    assert isinstance(EXP, int) and EXP >= 1

    # Small-input fallback: XLA fuses the elementwise op for free; pallas_call
    # launch + single DMA step (~us) would dominate.
    if nbytes < MIN_PALLAS_BYTES or n < LANES:
        s = jax.nn.sigmoid(x.astype(jnp.float32))
        return _static_int_pow(s, EXP).astype(orig_dtype)

    x_flat = x.reshape(-1)                 # contiguous reshape: no copy
    n_aligned = (n // LANES) * LANES

    if n_aligned == n:
        # Fast path: fully lane-aligned -> zero pad/slice copies.
        out2d = _pow_sigmoid_2d(x_flat.reshape(n // LANES, LANES))
        return out2d.reshape(orig_shape)

    # Misaligned size: kernel on the 128-aligned prefix, <128-element tail in jnp.
    # Avoids padding the whole array (concatenate) and slicing the whole output.
    prefix2d = x_flat[:n_aligned].reshape(n_aligned // LANES, LANES)
    out_prefix = _pow_sigmoid_2d(prefix2d).reshape(-1)
    tail = x_flat[n_aligned:]
    out_tail = _static_int_pow(jax.nn.sigmoid(tail.astype(jnp.float32)), EXP)
    out_tail = out_tail.astype(orig_dtype)
    return jnp.concatenate([out_prefix, out_tail]).reshape(orig_shape)


if __name__ == "__main__":
    key = jax.random.PRNGKey(0)
    k1, k2, k3 = jax.random.split(key, 3)

    # Small NCHW input matching the module spec (exercises the small-input fallback).
    x_small = jax.random.normal(k1, (2, 4, 16, 16), dtype=jnp.float32)
    # Medium, 128-aligned NCHW input (exercises the Pallas streaming fast path).
    x_med = jax.random.normal(k2, (2, 4, 128, 128), dtype=jnp.float32)
    # Misaligned element count (exercises the prefix-kernel + jnp-tail path).
    x_odd = jax.random.normal(k3, (2, 4, 95, 101), dtype=jnp.float32)

    for x in (x_small, x_med, x_odd):
        y = jax.block_until_ready(pow_sigmoid(x))
        y_ref = jax.nn.sigmoid(x) ** EXP
        assert y.shape == x.shape and y.dtype == x.dtype
        assert jnp.max(jnp.abs(y - y_ref)) < 1e-6

    print("KERNEL_OK")
</pallas_src>

<mosaic_0001>
module attributes {stable_mosaic.version = 11 : i64} {
  func.func @_pow_sigmoid_kernel(%arg0: i32, %arg1: memref<512x128xf32, #tpu.memory_space<vmem>>, %arg2: memref<512x128xf32, #tpu.memory_space<vmem>>) attributes {dimension_semantics = [#tpu.dimension_semantics<parallel>], iteration_bounds = array<i64: 2>, scalar_prefetch = 0 : i64, scratch_operands = 0 : i64, tpu.core_type = #tpu.core_type<tc>, window_params = [{transform_indices = @transform_0, window_bounds = array<i64: 512, 128>}, {transform_indices = @transform_1, window_bounds = array<i64: 512, 128>}]} {
    %c0 = arith.constant 0 : index
    %c0_0 = arith.constant 0 : index
    %0 = vector.load %arg1[%c0, %c0_0] : memref<512x128xf32, #tpu.memory_space<vmem>>, vector<512x128xf32>
    %1 = arith.negf %0 : vector<512x128xf32>
    %2 = math.exp %1 : vector<512x128xf32>
    %cst = arith.constant 1.000000e+00 : f32
    %3 = vector.broadcast %cst : f32 to vector<512x128xf32>
    %4 = arith.addf %3, %2 : vector<512x128xf32>
    %5 = arith.divf %3, %4 : vector<512x128xf32>
    %c0_1 = arith.constant 0 : index
    %c0_2 = arith.constant 0 : index
    %6 = vector.load %arg2[%c0_1, %c0_2] : memref<512x128xf32, #tpu.memory_space<vmem>>, vector<512x128xf32>
    tpu.vector_store %arg2[%c0_1, %c0_2], %5 {strides = array<i32>} : memref<512x128xf32, #tpu.memory_space<vmem>>, vector<512x128xf32>,
    return
  }
  func.func @transform_0(%arg0: i32) -> (i32, i32) {
    %c0_i32 = arith.constant 0 : i32
    %c0_i32_0 = arith.constant 0 : i32
    return %arg0, %c0_i32 : i32, i32
  }
  func.func @transform_1(%arg0: i32) -> (i32, i32) {
    %c0_i32 = arith.constant 0 : i32
    %c0_i32_0 = arith.constant 0 : i32
    return %arg0, %c0_i32 : i32, i32
  }
}

</mosaic_0001>

<llo_original>
// kernel: tpu_custom_call.1
$region0: #{tpu_custom_call.1}
  #allocation0 [shape = 'u32[]', space=smem, size = 0x4, offset = 0x4, fixed_abs, tag = 'smem constant byte address 0x4 - core index']
  #allocation1 [shape = 'u32[144,128]{1,0:T(1,128)}', space=vmem, size = 0x12000, scoped, tag = 'internal scratch']
  %s0 = inlined_call_operand.hbm [shape: f32[1024,128], index: 0, kind: input, shape index: {}]
  %s1 = inlined_call_operand.hbm [shape: f32[1024,128], index: 1, kind: output, shape index: {}]
  %s2 = sld [smem:[#allocation0]]
  $region41: #{tpu_custom_call.1} parent=0
    _
  %s4 = ssub.s32 1, %s2
  %s5 = scalar_select 0, %s4, %s2
  $region1: #{tpu_custom_call.1} parent=0
    #allocation2 [shape = 'u8[524288]{0}', space=vmem, size = 0x80000, scoped, tag = 'input window, operand 0']
    #allocation3 [shape = 's32[2]{0}', space=sflag, size = 0x8, scoped, tag = 'scoped memory for tpu_custom_call.1']
    #allocation4 [shape = 's32[2]{0}', space=sflag, size = 0x8, scoped, tag = 'scoped memory for tpu_custom_call.1']
    #allocation5 [shape = 'u8[524288]{0}', space=vmem, size = 0x80000, scoped, tag = 'output window, operand 0']
    %6 = vsyncpa [#allocation3], 0
    %s7 = scalar_lea.sflag [#allocation3], 1
    %8 = vsyncpa %s7, 0
    %9 = vsyncpa [#allocation4], 0
    %s10 = scalar_lea.sflag [#allocation4], 1
    %11 = vsyncpa %s10, 0
    loop: start=0, step=1, limit=4
    $region2: #{tpu_custom_call.1} parent=1 // loop_pre_header
      _
    $region3: #{tpu_custom_call.1} parent=1 // loop_header
      %s13 = sphi 0, %s17
      %p14 = scmp.ge.s32.totalorder %s13, 4
      %s23 = sphi 0, %s25
      %s26 = sphi 0, %s23
      %s27 = sphi 0, %s26
      %s43 = sphi 0, %s27
      %s49 = sphi 0, %s51
      %s52 = sphi 0, %s49
      %s53 = sphi 0, %s52
      %s69 = sphi 0, %s53
    $region4: #{tpu_custom_call.1} parent=1 // loop_header_branch
      %16 = sbr.rel (%p14) target = $region8
    $region5: #{tpu_custom_call.1} parent=1 // loop_body
      %s18 = ssub.s32 %s13, 1
      %s19 = ssub.s32 %s13, 2
      %s20 = sadd.s32 %s13, 1
      %s21 = ssub.s32 %s13, %s20
      %p22 = scmp.eq.s32.totalorder %s21, 0
      %s24 = sadd.s32 %s23, 1
      %s25 = scalar_select %p22, %s23, %s24
      %p28 = pneg %p22
      %p29 = scmp.eq.s32.totalorder %s13, 1
      %p30 = por %p28, %p29
      %p31 = scmp.ne.s32.totalorder %s23, %s26
      %p32 = scmp.eq.s32.totalorder %s13, 0
      %p33 = por %p31, %p32
      %p34 = scmp.ne.s32.totalorder %s23, %s26
      %p35 = scmp.eq.s32.totalorder %s18, 1
      %p36 = por %p34, %p35
      %p37 = scmp.ne.s32.totalorder %s26, %s27
      %p38 = scmp.eq.s32.totalorder %s18, 0
      %p39 = por %p37, %p38
      %p40 = scmp.ne.s32.totalorder %s26, %s27
      %p41 = scmp.eq.s32.totalorder %s19, 1
      %p42 = por %p40, %p41
      %p44 = scmp.ne.s32.totalorder %s27, %s43
      %p45 = scmp.eq.s32.totalorder %s19, 0
      %p46 = por %p44, %p45
      %s47 = ssub.s32 %s13, %s20
      %p48 = scmp.eq.s32.totalorder %s47, 0
      %s50 = sadd.s32 %s49, 1
      %s51 = scalar_select %p48, %s49, %s50
      %p54 = pneg %p48
      %p55 = scmp.eq.s32.totalorder %s13, 1
      %p56 = por %p54, %p55
      %p57 = scmp.ne.s32.totalorder %s49, %s52
      %p58 = scmp.eq.s32.totalorder %s13, 0
      %p59 = por %p57, %p58
      %p60 = scmp.ne.s32.totalorder %s49, %s52
      %p61 = scmp.eq.s32.totalorder %s18, 1
      %p62 = por %p60, %p61
      %p63 = scmp.ne.s32.totalorder %s52, %s53
      %p64 = scmp.eq.s32.totalorder %s18, 0
      %p65 = por %p63, %p64
      %p66 = scmp.ne.s32.totalorder %s52, %s53
      %p67 = scmp.eq.s32.totalorder %s19, 1
      %p68 = por %p66, %p67
      %p70 = scmp.ne.s32.totalorder %s53, %s69
      %p71 = scmp.eq.s32.totalorder %s19, 0
      %p72 = por %p70, %p71
      %p73 = scmp.le.s32.totalorder 1, %s13
      %p74 = scmp.lt.s32.totalorder %s13, 3
      %p75 = pnand %p73, %p74
      %p76 = pneg %p75
      // Predicated region
      $region9: #{tpu_custom_call.1} parent=5 // pred_check
        _
      $region10: #{tpu_custom_call.1} parent=5 // pred_check_branch
        %78 = sbr.rel (%p75) target = $region12
      $region11: #{tpu_custom_call.1} parent=5 // pred_region
        %s79 = ssub.s32 %s13, 1
      $region12: #{tpu_custom_call.1} parent=5 // pred_fallthru
        _
      %p80 = scmp.lt.s32.totalorder %s13, 2
      // Predicated region
      $region13: #{tpu_custom_call.1} parent=5 // pred_check
        %p81 = pneg %p80
      $region14: #{tpu_custom_call.1} parent=5 // pred_check_branch
        %83 = sbr.rel (%p81) target = $region16
      $region15: #{tpu_custom_call.1} parent=5 // pred_region
        // Predicated region
        $region17: #{tpu_custom_call.1} parent=15 // pred_check
          %p84 = pneg %p33
        $region18: #{tpu_custom_call.1} parent=15 // pred_check_branch
          %86 = sbr.rel (%p84) target = $region20
        $region19: #{tpu_custom_call.1} parent=15 // pred_region
          %s87 = sand.u32 %s23, 1
          %s88 = scalar_lea.sflag [#allocation3], %s87
          %s89 = sand.u32 %s23, 1
          %s90 = smul.addr %s89, 512
          %s91 = scalar_lea.vmem [#allocation2], %s90
          %s92 = smul.u32 64, %s13
          %s94 = ssub.s32 8192, 8192
          %95 = vsyncadd %s88, %s94
          %s96 = smul.addr %s92, 128
          %s97 = scalar_lea.hbm %s0, %s96
          %s98 = sshll.u32 %s91, 4
          %s99 = int_to_ptr.vmem [resolvable:$true] %s98
          %104 = dma.hbm_to_vmem [thread:$0]  %s97, 8192, %s99, %s88, 128, 128, 8
        $region20: #{tpu_custom_call.1} parent=15 // pred_fallthru
          _
      $region16: #{tpu_custom_call.1} parent=5 // pred_fallthru
        _
      %p105 = scmp.le.s32.totalorder 1, %s13
      %p106 = scmp.lt.s32.totalorder %s13, 3
      %p107 = pnand %p105, %p106
      %p108 = pneg %p107
      // Predicated region
      $region21: #{tpu_custom_call.1} parent=5 // pred_check
        _
      $region22: #{tpu_custom_call.1} parent=5 // pred_check_branch
        %110 = sbr.rel (%p107) target = $region24
      $region23: #{tpu_custom_call.1} parent=5 // pred_region
        %s111 = ssub.s32 %s13, 1
        %s112 = sand.u32 %s26, 1
        %s113 = scalar_lea.sflag [#allocation3], %s112
        %s114 = sand.u32 %s26, 1
        %s115 = smul.addr %s114, 512
        %s116 = scalar_lea.vmem [#allocation2], %s115
        // Predicated region
        $region25: #{tpu_custom_call.1} parent=23 // pred_check
          %p117 = pneg %p39
        $region26: #{tpu_custom_call.1} parent=23 // pred_check_branch
          %119 = sbr.rel (%p117) target = $region28
        $region27: #{tpu_custom_call.1} parent=23 // pred_region
          %120 = dma.done %s113, 8192
        $region28: #{tpu_custom_call.1} parent=23 // pred_fallthru
          _
        %s121 = sand.u32 %s26, 1
        %s122 = scalar_lea.sflag [#allocation3], %s121
        %s123 = sand.u32 %s26, 1
        %s124 = smul.addr %s123, 512
        %s125 = scalar_lea.vmem [#allocation2], %s124
        %p126 = pneg %p39
        %p127 = pneg %p36
        %p128 = pneg %p65
        %p129 = pneg %p62
        %s130 = sand.u32 %s52, 1
        %s131 = scalar_lea.sflag [#allocation4], %s130
        %s132 = sand.u32 %s52, 1
        %s133 = smul.addr %s132, 512
        %s134 = scalar_lea.vmem [#allocation5], %s133
        %s135 = smul.u32 64, %s18
        %s136 = smul.u32 64, %s18
        %v137 = vld [vmem:[%s116] sm:$0xff]
        %v138 = vld [vmem:[%s116 + $0x8] sm:$0xff]
        %v139 = vld [vmem:[%s116 + $0x10] sm:$0xff]
        %v140 = vld [vmem:[%s116 + $0x18] sm:$0xff]
        %v141 = vld [vmem:[%s116 + $0x20] sm:$0xff]
        %v142 = vld [vmem:[%s116 + $0x28] sm:$0xff]
        %v143 = vld [vmem:[%s116 + $0x30] sm:$0xff]
        %v144 = vld [vmem:[%s116 + $0x38] sm:$0xff]
        %v145 = vld [vmem:[%s116 + $0x40] sm:$0xff]
        %v146 = vld [vmem:[%s116 + $0x48] sm:$0xff]
        %v147 = vld [vmem:[%s116 + $0x50] sm:$0xff]
        %v148 = vld [vmem:[%s116 + $0x58] sm:$0xff]
        %v149 = vld [vmem:[%s116 + $0x60] sm:$0xff]
        %v150 = vld [vmem:[%s116 + $0x68] sm:$0xff]
        %v151 = vld [vmem:[%s116 + $0x70] sm:$0xff]
        %v152 = vld [vmem:[%s116 + $0x78] sm:$0xff]
        %v153 = vld [vmem:[%s116 + $0x80] sm:$0xff]
        %v154 = vld [vmem:[%s116 + $0x88] sm:$0xff]
        %v155 = vld [vmem:[%s116 + $0x90] sm:$0xff]
        %v156 = vld [vmem:[%s116 + $0x98] sm:$0xff]
        %v157 = vld [vmem:[%s116 + $0xa0] sm:$0xff]
        %v158 = vld [vmem:[%s116 + $0xa8] sm:$0xff]
        %v159 = vld [vmem:[%s116 + $0xb0] sm:$0xff]
        %v160 = vld [vmem:[%s116 + $0xb8] sm:$0xff]
        %v161 = vld [vmem:[%s116 + $0xc0] sm:$0xff]
        %v162 = vld [vmem:[%s116 + $0xc8] sm:$0xff]
        %v163 = vld [vmem:[%s116 + $0xd0] sm:$0xff]
        %v164 = vld [vmem:[%s116 + $0xd8] sm:$0xff]
        %v165 = vld [vmem:[%s116 + $0xe0] sm:$0xff]
        %v166 = vld [vmem:[%s116 + $0xe8] sm:$0xff]
        %v167 = vld [vmem:[%s116 + $0xf0] sm:$0xff]
        %v168 = vld [vmem:[%s116 + $0xf8] sm:$0xff]
        %v169 = vld [vmem:[%s116 + $0x100] sm:$0xff]
        %v170 = vld [vmem:[%s116 + $0x108] sm:$0xff]
        %v171 = vld [vmem:[%s116 + $0x110] sm:$0xff]
        %v172 = vld [vmem:[%s116 + $0x118] sm:$0xff]
        %v173 = vld [vmem:[%s116 + $0x120] sm:$0xff]
        %v174 = vld [vmem:[%s116 + $0x128] sm:$0xff]
        %v175 = vld [vmem:[%s116 + $0x130] sm:$0xff]
        %v176 = vld [vmem:[%s116 + $0x138] sm:$0xff]
        %v177 = vld [vmem:[%s116 + $0x140] sm:$0xff]
        %v178 = vld [vmem:[%s116 + $0x148] sm:$0xff]
        %v179 = vld [vmem:[%s116 + $0x150] sm:$0xff]
        %v180 = vld [vmem:[%s116 + $0x158] sm:$0xff]
        %v181 = vld [vmem:[%s116 + $0x160] sm:$0xff]
        %v182 = vld [vmem:[%s116 + $0x168] sm:$0xff]
        %v183 = vld [vmem:[%s116 + $0x170] sm:$0xff]
        %v184 = vld [vmem:[%s116 + $0x178] sm:$0xff]
        %v185 = vld [vmem:[%s116 + $0x180] sm:$0xff]
        %v186 = vld [vmem:[%s116 + $0x188] sm:$0xff]
        %v187 = vld [vmem:[%s116 + $0x190] sm:$0xff]
        %v188 = vld [vmem:[%s116 + $0x198] sm:$0xff]
        %v189 = vld [vmem:[%s116 + $0x1a0] sm:$0xff]
        %v190 = vld [vmem:[%s116 + $0x1a8] sm:$0xff]
        %v191 = vld [vmem:[%s116 + $0x1b0] sm:$0xff]
        %v192 = vld [vmem:[%s116 + $0x1b8] sm:$0xff]
        %v193 = vld [vmem:[%s116 + $0x1c0] sm:$0xff]
        %v194 = vld [vmem:[%s116 + $0x1c8] sm:$0xff]
        %v195 = vld [vmem:[%s116 + $0x1d0] sm:$0xff]
        %v196 = vld [vmem:[%s116 + $0x1d8] sm:$0xff]
        %v197 = vld [vmem:[%s116 + $0x1e0] sm:$0xff]
        %v198 = vld [vmem:[%s116 + $0x1e8] sm:$0xff]
        %v199 = vld [vmem:[%s116 + $0x1f0] sm:$0xff]
        %v200 = vld [vmem:[%s116 + $0x1f8] sm:$0xff]
        %v201 = vxor.u32 %v137, 2147483648
        %v202 = vxor.u32 %v138, 2147483648
        %v203 = vxor.u32 %v139, 2147483648
        %v204 = vxor.u32 %v140, 2147483648
        %v205 = vxor.u32 %v141, 2147483648
        %v206 = vxor.u32 %v142, 2147483648
        %v207 = vxor.u32 %v143, 2147483648
        %v208 = vxor.u32 %v144, 2147483648
        %v209 = vxor.u32 %v145, 2147483648
        %v210 = vxor.u32 %v146, 2147483648
        %v211 = vxor.u32 %v147, 2147483648
        %v212 = vxor.u32 %v148, 2147483648
        %v213 = vxor.u32 %v149, 2147483648
        %v214 = vxor.u32 %v150, 2147483648
        %v215 = vxor.u32 %v151, 2147483648
        %v216 = vxor.u32 %v152, 2147483648
        %v217 = vxor.u32 %v153, 2147483648
        %v218 = vxor.u32 %v154, 2147483648
        %v219 = vxor.u32 %v155, 2147483648
        %v220 = vxor.u32 %v156, 2147483648
        %v221 = vxor.u32 %v157, 2147483648
        %v222 = vxor.u32 %v158, 2147483648
        %v223 = vxor.u32 %v159, 2147483648
        %v224 = vxor.u32 %v160, 2147483648
        %v225 = vxor.u32 %v161, 2147483648
        %v226 = vxor.u32 %v162, 2147483648
        %v227 = vxor.u32 %v163, 2147483648
        %v228 = vxor.u32 %v164, 2147483648
        %v229 = vxor.u32 %v165, 2147483648
        %v230 = vxor.u32 %v166, 2147483648
        %v231 = vxor.u32 %v167, 2147483648
        %v232 = vxor.u32 %v168, 2147483648
        %v233 = vxor.u32 %v169, 2147483648
        %v234 = vxor.u32 %v170, 2147483648
        %v235 = vxor.u32 %v171, 2147483648
        %v236 = vxor.u32 %v172, 2147483648
        %v237 = vxor.u32 %v173, 2147483648
        %v238 = vxor.u32 %v174, 2147483648
        %v239 = vxor.u32 %v175, 2147483648
        %v240 = vxor.u32 %v176, 2147483648
        %v241 = vxor.u32 %v177, 2147483648
        %v242 = vxor.u32 %v178, 2147483648
        %v243 = vxor.u32 %v179, 2147483648
        %v244 = vxor.u32 %v180, 2147483648
        %v245 = vxor.u32 %v181, 2147483648
        %v246 = vxor.u32 %v182, 2147483648
        %v247 = vxor.u32 %v183, 2147483648
        %v248 = vxor.u32 %v184, 2147483648
        %v249 = vxor.u32 %v185, 2147483648
        %v250 = vxor.u32 %v186, 2147483648
        %v251 = vxor.u32 %v187, 2147483648
        %v252 = vxor.u32 %v188, 2147483648
        %v253 = vxor.u32 %v189, 2147483648
        %v254 = vxor.u32 %v190, 2147483648
        %v255 = vxor.u32 %v191, 2147483648
        %v256 = vxor.u32 %v192, 2147483648
        %v257 = vxor.u32 %v193, 2147483648
        %v258 = vxor.u32 %v194, 2147483648
        %v259 = vxor.u32 %v195, 2147483648
        %v260 = vxor.u32 %v196, 2147483648
        %v261 = vxor.u32 %v197, 2147483648
        %v262 = vxor.u32 %v198, 2147483648
        %v263 = vxor.u32 %v199, 2147483648
        %v264 = vxor.u32 %v200, 2147483648
        %v265 = vmul.f32 %v201, 1.442695
        %v266 = vpow.pop %v265
        %v267 = vmul.f32 %v202, 1.442695
        %v268 = vpow.pop %v267
        %v269 = vmul.f32 %v203, 1.442695
        %v270 = vpow.pop %v269
        %v271 = vmul.f32 %v204, 1.442695
        %v272 = vpow.pop %v271
        %v273 = vmul.f32 %v205, 1.442695
        %v274 = vpow.pop %v273
        %v275 = vmul.f32 %v206, 1.442695
        %v276 = vpow.pop %v275
        %v277 = vmul.f32 %v207, 1.442695
        %v278 = vpow.pop %v277
        %v279 = vmul.f32 %v208, 1.442695
        %v280 = vpow.pop %v279
        %v281 = vmul.f32 %v209, 1.442695
        %v282 = vpow.pop %v281
        %v283 = vmul.f32 %v210, 1.442695
        %v284 = vpow.pop %v283
        %v285 = vmul.f32 %v211, 1.442695
        %v286 = vpow.pop %v285
        %v287 = vmul.f32 %v212, 1.442695
        %v288 = vpow.pop %v287
        %v289 = vmul.f32 %v213, 1.442695
        %v290 = vpow.pop %v289
        %v291 = vmul.f32 %v214, 1.442695
        %v292 = vpow.pop %v291
        %v293 = vmul.f32 %v215, 1.442695
        %v294 = vpow.pop %v293
        %v295 = vmul.f32 %v216, 1.442695
        %v296 = vpow.pop %v295
        %v297 = vmul.f32 %v217, 1.442695
        %v298 = vpow.pop %v297
        %v299 = vmul.f32 %v218, 1.442695
        %v300 = vpow.pop %v299
        %v301 = vmul.f32 %v219, 1.442695
        %v302 = vpow.pop %v301
        %v303 = vmul.f32 %v220, 1.442695
        %v304 = vpow.pop %v303
        %v305 = vmul.f32 %v221, 1.442695
        %v306 = vpow.pop %v305
        %v307 = vmul.f32 %v222, 1.442695
        %v308 = vpow.pop %v307
        %v309 = vmul.f32 %v223, 1.442695
        %v310 = vpow.pop %v309
        %v311 = vmul.f32 %v224, 1.442695
        %v312 = vpow.pop %v311
        %v313 = vmul.f32 %v225, 1.442695
        %v314 = vpow.pop %v313
        %v315 = vmul.f32 %v226, 1.442695
        %v316 = vpow.pop %v315
        %v317 = vmul.f32 %v227, 1.442695
        %v318 = vpow.pop %v317
        %v319 = vmul.f32 %v228, 1.442695
        %v320 = vpow.pop %v319
        %v321 = vmul.f32 %v229, 1.442695
        %v322 = vpow.pop %v321
        %v323 = vmul.f32 %v230, 1.442695
        %v324 = vpow.pop %v323
        %v325 = vmul.f32 %v231, 1.442695
        %v326 = vpow.pop %v325
        %v327 = vmul.f32 %v232, 1.442695
        %v328 = vpow.pop %v327
        %v329 = vmul.f32 %v233, 1.442695
        %v330 = vpow.pop %v329
        %v331 = vmul.f32 %v234, 1.442695
        %v332 = vpow.pop %v331
        %v333 = vmul.f32 %v235, 1.442695
        %v334 = vpow.pop %v333
        %v335 = vmul.f32 %v236, 1.442695
        %v336 = vpow.pop %v335
        %v337 = vmul.f32 %v237, 1.442695
        %v338 = vpow.pop %v337
        %v339 = vmul.f32 %v238, 1.442695
        %v340 = vpow.pop %v339
        %v341 = vmul.f32 %v239, 1.442695
        %v342 = vpow.pop %v341
        %v343 = vmul.f32 %v240, 1.442695
        %v344 = vpow.pop %v343
        %v345 = vmul.f32 %v241, 1.442695
        %v346 = vpow.pop %v345
        %v347 = vmul.f32 %v242, 1.442695
        %v348 = vpow.pop %v347
        %v349 = vmul.f32 %v243, 1.442695
        %v350 = vpow.pop %v349
        %v351 = vmul.f32 %v244, 1.442695
        %v352 = vpow.pop %v351
        %v353 = vmul.f32 %v245, 1.442695
        %v354 = vpow.pop %v353
        %v355 = vmul.f32 %v246, 1.442695
        %v356 = vpow.pop %v355
        %v357 = vmul.f32 %v247, 1.442695
        %v358 = vpow.pop %v357
        %v359 = vmul.f32 %v248, 1.442695
        %v360 = vpow.pop %v359
        %v361 = vmul.f32 %v249, 1.442695
        %v362 = vpow.pop %v361
        %v363 = vmul.f32 %v250, 1.442695
        %v364 = vpow.pop %v363
        %v365 = vmul.f32 %v251, 1.442695
        %v366 = vpow.pop %v365
        %v367 = vmul.f32 %v252, 1.442695
        %v368 = vpow.pop %v367
        %v369 = vmul.f32 %v253, 1.442695
        %v370 = vpow.pop %v369
        %v371 = vmul.f32 %v254, 1.442695
        %v372 = vpow.pop %v371
        %v373 = vmul.f32 %v255, 1.442695
        %v374 = vpow.pop %v373
        %v375 = vmul.f32 %v256, 1.442695
        %v376 = vpow.pop %v375
        %v377 = vmul.f32 %v257, 1.442695
        %v378 = vpow.pop %v377
        %v379 = vmul.f32 %v258, 1.442695
        %v380 = vpow.pop %v379
        %v381 = vmul.f32 %v259, 1.442695
        %v382 = vpow.pop %v381
        %v383 = vmul.f32 %v260, 1.442695
        %v384 = vpow.pop %v383
        %v385 = vmul.f32 %v261, 1.442695
        %v386 = vpow.pop %v385
        %v387 = vmul.f32 %v262, 1.442695
        %v388 = vpow.pop %v387
        %v389 = vmul.f32 %v263, 1.442695
        %v390 = vpow.pop %v389
        %v391 = vmul.f32 %v264, 1.442695
        %v392 = vpow.pop %v391
        %v393 = vadd.f32 %v266, 1.0
        %v394 = vadd.f32 %v268, 1.0
        %v395 = vadd.f32 %v270, 1.0
        %v396 = vadd.f32 %v272, 1.0
        %v397 = vadd.f32 %v274, 1.0
        %v398 = vadd.f32 %v276, 1.0
        %v399 = vadd.f32 %v278, 1.0
        %v400 = vadd.f32 %v280, 1.0
        %v401 = vadd.f32 %v282, 1.0
        %v402 = vadd.f32 %v284, 1.0
        %v403 = vadd.f32 %v286, 1.0
        %v404 = vadd.f32 %v288, 1.0
        %v405 = vadd.f32 %v290, 1.0
        %v406 = vadd.f32 %v292, 1.0
        %v407 = vadd.f32 %v294, 1.0
        %v408 = vadd.f32 %v296, 1.0
        %v409 = vadd.f32 %v298, 1.0
        %v410 = vadd.f32 %v300, 1.0
        %v411 = vadd.f32 %v302, 1.0
        %v412 = vadd.f32 %v304, 1.0
        %v413 = vadd.f32 %v306, 1.0
        %v414 = vadd.f32 %v308, 1.0
        %v415 = vadd.f32 %v310, 1.0
        %v416 = vadd.f32 %v312, 1.0
        %v417 = vadd.f32 %v314, 1.0
        %v418 = vadd.f32 %v316, 1.0
        %v419 = vadd.f32 %v318, 1.0
        %v420 = vadd.f32 %v320, 1.0
        %v421 = vadd.f32 %v322, 1.0
        %v422 = vadd.f32 %v324, 1.0
        %v423 = vadd.f32 %v326, 1.0
        %v424 = vadd.f32 %v328, 1.0
        %v425 = vadd.f32 %v330, 1.0
        %v426 = vadd.f32 %v332, 1.0
        %v427 = vadd.f32 %v334, 1.0
        %v428 = vadd.f32 %v336, 1.0
        %v429 = vadd.f32 %v338, 1.0
        %v430 = vadd.f32 %v340, 1.0
        %v431 = vadd.f32 %v342, 1.0
        %v432 = vadd.f32 %v344, 1.0
        %v433 = vadd.f32 %v346, 1.0
        %v434 = vadd.f32 %v348, 1.0
        %v435 = vadd.f32 %v350, 1.0
        %v436 = vadd.f32 %v352, 1.0
        %v437 = vadd.f32 %v354, 1.0
        %v438 = vadd.f32 %v356, 1.0
        %v439 = vadd.f32 %v358, 1.0
        %v440 = vadd.f32 %v360, 1.0
        %v441 = vadd.f32 %v362, 1.0
        %v442 = vadd.f32 %v364, 1.0
        %v443 = vadd.f32 %v366, 1.0
        %v444 = vadd.f32 %v368, 1.0
        %v445 = vadd.f32 %v370, 1.0
        %v446 = vadd.f32 %v372, 1.0
        %v447 = vadd.f32 %v374, 1.0
        %v448 = vadd.f32 %v376, 1.0
        %v449 = vadd.f32 %v378, 1.0
        %v450 = vadd.f32 %v380, 1.0
        %v451 = vadd.f32 %v382, 1.0
        %v452 = vadd.f32 %v384, 1.0
        %v453 = vadd.f32 %v386, 1.0
        %v454 = vadd.f32 %v388, 1.0
        %v455 = vadd.f32 %v390, 1.0
        %v456 = vadd.f32 %v392, 1.0
        %v457 = vrcp.pop %v393
        %v458 = vmul.f32 1.0, %v457
        %v459 = vrcp.pop %v394
        %v460 = vmul.f32 1.0, %v459
        %v461 = vrcp.pop %v395
        %v462 = vmul.f32 1.0, %v461
        %v463 = vrcp.pop %v396
        %v464 = vmul.f32 1.0, %v463
        %v465 = vrcp.pop %v397
        %v466 = vmul.f32 1.0, %v465
        %v467 = vrcp.pop %v398
        %v468 = vmul.f32 1.0, %v467
        %v469 = vrcp.pop %v399
        %v470 = vmul.f32 1.0, %v469
        %v471 = vrcp.pop %v400
        %v472 = vmul.f32 1.0, %v471
        %v473 = vrcp.pop %v401
        %v474 = vmul.f32 1.0, %v473
        %v475 = vrcp.pop %v402
        %v476 = vmul.f32 1.0, %v475
        %v477 = vrcp.pop %v403
        %v478 = vmul.f32 1.0, %v477
        %v479 = vrcp.pop %v404
        %v480 = vmul.f32 1.0, %v479
        %v481 = vrcp.pop %v405
        %v482 = vmul.f32 1.0, %v481
        %v483 = vrcp.pop %v406
        %v484 = vmul.f32 1.0, %v483
        %v485 = vrcp.pop %v407
        %v486 = vmul.f32 1.0, %v485
        %v487 = vrcp.pop %v408
        %v488 = vmul.f32 1.0, %v487
        %v489 = vrcp.pop %v409
        %v490 = vmul.f32 1.0, %v489
        %v491 = vrcp.pop %v410
        %v492 = vmul.f32 1.0, %v491
        %v493 = vrcp.pop %v411
        %v494 = vmul.f32 1.0, %v493
        %v495 = vrcp.pop %v412
        %v496 = vmul.f32 1.0, %v495
        %v497 = vrcp.pop %v413
        %v498 = vmul.f32 1.0, %v497
        %v499 = vrcp.pop %v414
        %v500 = vmul.f32 1.0, %v499
        %v501 = vrcp.pop %v415
        %v502 = vmul.f32 1.0, %v501
        %v503 = vrcp.pop %v416
        %v504 = vmul.f32 1.0, %v503
        %v505 = vrcp.pop %v417
        %v506 = vmul.f32 1.0, %v505
        %v507 = vrcp.pop %v418
        %v508 = vmul.f32 1.0, %v507
        %v509 = vrcp.pop %v419
        %v510 = vmul.f32 1.0, %v509
        %v511 = vrcp.pop %v420
        %v512 = vmul.f32 1.0, %v511
        %v513 = vrcp.pop %v421
        %v514 = vmul.f32 1.0, %v513
        %v515 = vrcp.pop %v422
        %v516 = vmul.f32 1.0, %v515
        %v517 = vrcp.pop %v423
        %v518 = vmul.f32 1.0, %v517
        %v519 = vrcp.pop %v424
        %v520 = vmul.f32 1.0, %v519
        %v521 = vrcp.pop %v425
        %v522 = vmul.f32 1.0, %v521
        %v523 = vrcp.pop %v426
        %v524 = vmul.f32 1.0, %v523
        %v525 = vrcp.pop %v427
        %v526 = vmul.f32 1.0, %v525
        %v527 = vrcp.pop %v428
        %v528 = vmul.f32 1.0, %v527
        %v529 = vrcp.pop %v429
        %v530 = vmul.f32 1.0, %v529
        %v531 = vrcp.pop %v430
        %v532 = vmul.f32 1.0, %v531
        %v533 = vrcp.pop %v431
        %v534 = vmul.f32 1.0, %v533
        %v535 = vrcp.pop %v432
        %v536 = vmul.f32 1.0, %v535
        %v537 = vrcp.pop %v433
        %v538 = vmul.f32 1.0, %v537
        %v539 = vrcp.pop %v434
        %v540 = vmul.f32 1.0, %v539
        %v541 = vrcp.pop %v435
        %v542 = vmul.f32 1.0, %v541
        %v543 = vrcp.pop %v436
        %v544 = vmul.f32 1.0, %v543
        %v545 = vrcp.pop %v437
        %v546 = vmul.f32 1.0, %v545
        %v547 = vrcp.pop %v438
        %v548 = vmul.f32 1.0, %v547
        %v549 = vrcp.pop %v439
        %v550 = vmul.f32 1.0, %v549
        %v551 = vrcp.pop %v440
        %v552 = vmul.f32 1.0, %v551
        %v553 = vrcp.pop %v441
        %v554 = vmul.f32 1.0, %v553
        %v555 = vrcp.pop %v442
        %v556 = vmul.f32 1.0, %v555
        %v557 = vrcp.pop %v443
        %v558 = vmul.f32 1.0, %v557
        %v559 = vrcp.pop %v444
        %v560 = vmul.f32 1.0, %v559
        %v561 = vrcp.pop %v445
        %v562 = vmul.f32 1.0, %v561
        %v563 = vrcp.pop %v446
        %v564 = vmul.f32 1.0, %v563
        %v565 = vrcp.pop %v447
        %v566 = vmul.f32 1.0, %v565
        %v567 = vrcp.pop %v448
        %v568 = vmul.f32 1.0, %v567
        %v569 = vrcp.pop %v449
        %v570 = vmul.f32 1.0, %v569
        %v571 = vrcp.pop %v450
        %v572 = vmul.f32 1.0, %v571
        %v573 = vrcp.pop %v451
        %v574 = vmul.f32 1.0, %v573
        %v575 = vrcp.pop %v452
        %v576 = vmul.f32 1.0, %v575
        %v577 = vrcp.pop %v453
        %v578 = vmul.f32 1.0, %v577
        %v579 = vrcp.pop %v454
        %v580 = vmul.f32 1.0, %v579
        %v581 = vrcp.pop %v455
        %v582 = vmul.f32 1.0, %v581
        %v583 = vrcp.pop %v456
        %v584 = vmul.f32 1.0, %v583
        %585 = vst [vmem:[%s134] sm:$0xff] %v458
        %586 = vst [vmem:[%s134 + $0x8] sm:$0xff] %v460
        %587 = vst [vmem:[%s134 + $0x10] sm:$0xff] %v462
        %588 = vst [vmem:[%s134 + $0x18] sm:$0xff] %v464
        %589 = vst [vmem:[%s134 + $0x20] sm:$0xff] %v466
        %590 = vst [vmem:[%s134 + $0x28] sm:$0xff] %v468
        %591 = vst [vmem:[%s134 + $0x30] sm:$0xff] %v470
        %592 = vst [vmem:[%s134 + $0x38] sm:$0xff] %v472
        %593 = vst [vmem:[%s134 + $0x40] sm:$0xff] %v474
        %594 = vst [vmem:[%s134 + $0x48] sm:$0xff] %v476
        %595 = vst [vmem:[%s134 + $0x50] sm:$0xff] %v478
        %596 = vst [vmem:[%s134 + $0x58] sm:$0xff] %v480
        %597 = vst [vmem:[%s134 + $0x60] sm:$0xff] %v482
        %598 = vst [vmem:[%s134 + $0x68] sm:$0xff] %v484
        %599 = vst [vmem:[%s134 + $0x70] sm:$0xff] %v486
        %600 = vst [vmem:[%s134 + $0x78] sm:$0xff] %v488
        %601 = vst [vmem:[%s134 + $0x80] sm:$0xff] %v490
        %602 = vst [vmem:[%s134 + $0x88] sm:$0xff] %v492
        %603 = vst [vmem:[%s134 + $0x90] sm:$0xff] %v494
        %604 = vst [vmem:[%s134 + $0x98] sm:$0xff] %v496
        %605 = vst [vmem:[%s134 + $0xa0] sm:$0xff] %v498
        %606 = vst [vmem:[%s134 + $0xa8] sm:$0xff] %v500
        %607 = vst [vmem:[%s134 + $0xb0] sm:$0xff] %v502
        %608 = vst [vmem:[%s134 + $0xb8] sm:$0xff] %v504
        %609 = vst [vmem:[%s134 + $0xc0] sm:$0xff] %v506
        %610 = vst [vmem:[%s134 + $0xc8] sm:$0xff] %v508
        %611 = vst [vmem:[%s134 + $0xd0] sm:$0xff] %v510
        %612 = vst [vmem:[%s134 + $0xd8] sm:$0xff] %v512
        %613 = vst [vmem:[%s134 + $0xe0] sm:$0xff] %v514
        %614 = vst [vmem:[%s134 + $0xe8] sm:$0xff] %v516
        %615 = vst [vmem:[%s134 + $0xf0] sm:$0xff] %v518
        %616 = vst [vmem:[%s134 + $0xf8] sm:$0xff] %v520
        %617 = vst [vmem:[%s134 + $0x100] sm:$0xff] %v522
        %618 = vst [vmem:[%s134 + $0x108] sm:$0xff] %v524
        %619 = vst [vmem:[%s134 + $0x110] sm:$0xff] %v526
        %620 = vst [vmem:[%s134 + $0x118] sm:$0xff] %v528
        %621 = vst [vmem:[%s134 + $0x120] sm:$0xff] %v530
        %622 = vst [vmem:[%s134 + $0x128] sm:$0xff] %v532
        %623 = vst [vmem:[%s134 + $0x130] sm:$0xff] %v534
        %624 = vst [vmem:[%s134 + $0x138] sm:$0xff] %v536
        %625 = vst [vmem:[%s134 + $0x140] sm:$0xff] %v538
        %626 = vst [vmem:[%s134 + $0x148] sm:$0xff] %v540
        %627 = vst [vmem:[%s134 + $0x150] sm:$0xff] %v542
        %628 = vst [vmem:[%s134 + $0x158] sm:$0xff] %v544
        %629 = vst [vmem:[%s134 + $0x160] sm:$0xff] %v546
        %630 = vst [vmem:[%s134 + $0x168] sm:$0xff] %v548
        %631 = vst [vmem:[%s134 + $0x170] sm:$0xff] %v550
        %632 = vst [vmem:[%s134 + $0x178] sm:$0xff] %v552
        %633 = vst [vmem:[%s134 + $0x180] sm:$0xff] %v554
        %634 = vst [vmem:[%s134 + $0x188] sm:$0xff] %v556
        %635 = vst [vmem:[%s134 + $0x190] sm:$0xff] %v558
        %636 = vst [vmem:[%s134 + $0x198] sm:$0xff] %v560
        %637 = vst [vmem:[%s134 + $0x1a0] sm:$0xff] %v562
        %638 = vst [vmem:[%s134 + $0x1a8] sm:$0xff] %v564
        %639 = vst [vmem:[%s134 + $0x1b0] sm:$0xff] %v566
        %640 = vst [vmem:[%s134 + $0x1b8] sm:$0xff] %v568
        %641 = vst [vmem:[%s134 + $0x1c0] sm:$0xff] %v570
        %642 = vst [vmem:[%s134 + $0x1c8] sm:$0xff] %v572
        %643 = vst [vmem:[%s134 + $0x1d0] sm:$0xff] %v574
        %644 = vst [vmem:[%s134 + $0x1d8] sm:$0xff] %v576
        %645 = vst [vmem:[%s134 + $0x1e0] sm:$0xff] %v578
        %646 = vst [vmem:[%s134 + $0x1e8] sm:$0xff] %v580
        %647 = vst [vmem:[%s134 + $0x1f0] sm:$0xff] %v582
        %648 = vst [vmem:[%s134 + $0x1f8] sm:$0xff] %v584
        %s649 = sand.u32 %s52, 1
        %s650 = scalar_lea.sflag [#allocation4], %s649
        %s651 = sand.u32 %s52, 1
        %s652 = smul.addr %s651, 512
        %s653 = scalar_lea.vmem [#allocation5], %s652
        // Predicated region
        $region29: #{tpu_custom_call.1} parent=23 // pred_check
          %p654 = pneg %p62
        $region30: #{tpu_custom_call.1} parent=23 // pred_check_branch
          %656 = sbr.rel (%p654) target = $region32
        $region31: #{tpu_custom_call.1} parent=23 // pred_region
          %s657 = smul.u32 64, %s18
          %s659 = ssub.s32 8192, 8192
          %660 = vsyncadd %s650, %s659
          %s661 = smul.addr %s657, 128
          %s662 = scalar_lea.hbm %s1, %s661
          %s663 = sshll.u32 %s653, 4
          %s664 = int_to_ptr.vmem [resolvable:$true] %s663
          %669 = dma.vmem_to_hbm [thread:$0]  %s664, 8192, %s662, %s650, 128, 128, 8
        $region32: #{tpu_custom_call.1} parent=23 // pred_fallthru
          _
      $region24: #{tpu_custom_call.1} parent=5 // pred_fallthru
        _
      %p670 = scmp.le.s32.totalorder 2, %s13
      // Predicated region
      $region33: #{tpu_custom_call.1} parent=5 // pred_check
        %p671 = pneg %p670
      $region34: #{tpu_custom_call.1} parent=5 // pred_check_branch
        %673 = sbr.rel (%p671) target = $region36
      $region35: #{tpu_custom_call.1} parent=5 // pred_region
        %s674 = ssub.s32 %s13, 2
        // Predicated region
        $region37: #{tpu_custom_call.1} parent=35 // pred_check
          %p675 = pneg %p68
        $region38: #{tpu_custom_call.1} parent=35 // pred_check_branch
          %677 = sbr.rel (%p675) target = $region40
        $region39: #{tpu_custom_call.1} parent=35 // pred_region
          %s678 = sand.u32 %s53, 1
          %s679 = scalar_lea.sflag [#allocation4], %s678
          %s680 = sand.u32 %s53, 1
          %s681 = smul.addr %s680, 512
          %s682 = scalar_lea.vmem [#allocation5], %s681
          %683 = dma.done %s679, 8192
        $region40: #{tpu_custom_call.1} parent=35 // pred_fallthru
          _
      $region36: #{tpu_custom_call.1} parent=5 // pred_fallthru
        _
    $region6: #{tpu_custom_call.1} parent=1 // loop_footer
      %s17 = sadd.s32 1, %s13
    $region7: #{tpu_custom_call.1} parent=1 // loop_footer_branch
      %12 = sbr.rel target = $region3
    $region8: #{tpu_custom_call.1} parent=1 // loop_exit
      _
    %684 = vsyncpa [#allocation3], 1
    %s685 = scalar_lea.sflag [#allocation3], 1
    %686 = vsyncpa %s685, 1
    %687 = vsyncpa [#allocation4], 1
    %s688 = scalar_lea.sflag [#allocation4], 1
    %689 = vsyncpa %s688, 1

</llo_original>
